<compile_context>
chip_gen: v7x
topology: tpu7x:2x2x1
jax: 0.10.0
libtpu: 0.0.40
codegen_flags: <defaults>
</compile_context>

<pallas_src>
import functools

import jax
import jax.numpy as jnp
from jax.experimental import pallas as pl
from jax.experimental.pallas import tpu as pltpu


def _const_scale_kernel(x_ref, o_ref, *, scale):
    # `scale` is a Python float closed over at trace time (weak-typed, so the
    # multiply stays in x's dtype; the astype is a no-op for float inputs).
    # Note: for bf16 inputs this multiplies in bf16 (one ulp-level rounding per
    # element vs. an f32 buffer multiply) — acceptable for a fixed scale layer.
    o_ref[...] = (x_ref[...] * scale).astype(o_ref.dtype)


_POW2_WIDTHS = (4096, 2048, 1024, 512, 256, 128)
_SMALL_BYTES = 1 << 20  # below ~1 MiB a standalone pallas_call is pure overhead


def _target_tile_bytes() -> int:
    """~4 MiB tiles on v6e/v7x (fewer grid steps at ~0.35us each); ~2 MiB on v5e
    (slower HBM makes per-step overhead proportionally smaller, and scoped VMEM
    is tighter by default). Detection is best-effort; the conservative 2 MiB
    fallback still sits ~85% of HBM roofline on every generation."""
    try:
        info = pltpu.get_tpu_info()
        txt = str(getattr(info, "chip_version", "")).lower()
        if "v5" in txt:
            return 2 * 1024 * 1024
        return 4 * 1024 * 1024
    except Exception:
        return 2 * 1024 * 1024


def _choose_width(n_elem: int):
    """Widest lane-dense width (multiple of 128) dividing n_elem, or None when
    n_elem is not a multiple of 128 (caller then uses the 1-D tiling path)."""
    if n_elem % 128 != 0:
        return None
    for w in _POW2_WIDTHS:
        if n_elem % w == 0:
            return w
    # n_elem = 128 * m where no pow2 candidate divides: take the largest
    # divisor of m capped at 32 -> width is always a multiple of 128.
    m = n_elem // 128
    for cand in range(32, 1, -1):
        if m % cand == 0:
            return 128 * cand
    return 128


def _choose_tile_rows(rows: int, width: int, itemsize: int, target_bytes: int) -> int:
    tr = max(1, target_bytes // (width * itemsize))
    if rows >= 64:
        # Guarantee >= 2 grid blocks so v7x's second TensorCore isn't idle.
        tr = min(tr, rows // 2)
    if tr >= rows:
        return rows  # single full-extent block (always a valid block dim)
    # Multiple of 32 sublanes covers f32 (8), bf16 (16) and int8/fp8 (32) packing.
    tr = max(32, (tr // 32) * 32)
    return min(tr, rows)


def _choose_tile_len_1d(n: int, itemsize: int, target_bytes: int) -> int:
    bl = max(1024, ((target_bytes // itemsize) // 1024) * 1024)
    if n >= 2048:
        # Keep >= 2 grid blocks for v7x megacore on mid-sized tensors.
        bl = min(bl, max(1024, ((n // 2) // 1024) * 1024))
    return n if bl >= n else bl


def const_scale_layer(x: jax.Array, scale: float, *, force_pallas: bool = False) -> jax.Array:
    """out = x * scale (ConstScaleLayer.forward) via a tiled, pipelined Pallas kernel."""
    n_elem = x.size
    if n_elem == 0 or not jnp.issubdtype(x.dtype, jnp.floating):
        # Empty tensors or integer inputs: mirror framework promotion directly
        # (int * float buffer promotes to float) instead of round-tripping dtypes.
        return x * jnp.asarray(scale)

    nbytes = n_elem * x.dtype.itemsize
    if nbytes < _SMALL_BYTES and not force_pallas:
        # Tiny tensor: let XLA fuse the scale into producer/consumer ops instead
        # of paying an opaque custom call + dedicated HBM round trip.
        return x * jnp.asarray(scale, dtype=x.dtype)

    orig_shape = x.shape
    target_bytes = _target_tile_bytes()
    kernel = functools.partial(_const_scale_kernel, scale=float(scale))
    cost = pl.CostEstimate(flops=n_elem, transcendentals=0, bytes_accessed=2 * nbytes)
    cparams = pltpu.CompilerParams(
        # Independent tiles: lets Mosaic shard the grid across both v7x
        # TensorCores; harmless on single-TC v5e/v6e.
        dimension_semantics=("parallel",),
        # Deliberate headroom: double-buffered in+out at 4 MiB tiles ~= 16 MiB
        # resident; 32 MiB is within scoped/physical VMEM on v5e/v6e/v7x.
        vmem_limit_bytes=32 * 1024 * 1024,
    )

    width = _choose_width(n_elem)
    if width is not None:
        rows = n_elem // width
        x2d = x.reshape(rows, width)  # view-style reshape, no pad/concat copy
        tr = _choose_tile_rows(rows, width, x.dtype.itemsize, target_bytes)
        out = pl.pallas_call(
            kernel,
            out_shape=jax.ShapeDtypeStruct((rows, width), x.dtype),
            grid=(pl.cdiv(rows, tr),),
            in_specs=[pl.BlockSpec((tr, width), lambda i: (i, 0))],
            out_specs=pl.BlockSpec((tr, width), lambda i: (i, 0)),
            compiler_params=cparams,
            cost_estimate=cost,
        )(x2d)
    else:
        # n_elem not a multiple of 128: 1-D view tiled by a multiple-of-1024
        # block so only the final partial block is masked (never a sub-128
        # lane width on every store).
        x1d = x.reshape(n_elem)
        bl = _choose_tile_len_1d(n_elem, x.dtype.itemsize, target_bytes)
        out = pl.pallas_call(
            kernel,
            out_shape=jax.ShapeDtypeStruct((n_elem,), x.dtype),
            grid=(pl.cdiv(n_elem, bl),),
            in_specs=[pl.BlockSpec((bl,), lambda i: (i,))],
            out_specs=pl.BlockSpec((bl,), lambda i: (i,)),
            compiler_params=cparams,
            cost_estimate=cost,
        )(x1d)

    return out.reshape(orig_shape)


if __name__ == "__main__":
    key = jax.random.PRNGKey(0)
    # Small NCHW input consistent with a feature-map scaling layer.
    x = jax.random.normal(key, (2, 4, 16, 16), dtype=jnp.float32)
    scale = 2.5  # fixed scale buffer from the module __init__

    # force_pallas=True so the Pallas kernel is exercised even at demo size
    # (production callers get the fused plain-JAX path for tiny tensors).
    out = const_scale_layer(x, scale, force_pallas=True)
    out = jax.block_until_ready(out)

    ref = x * jnp.float32(scale)
    assert out.shape == x.shape and out.dtype == x.dtype
    assert jnp.allclose(out, ref, atol=1e-6, rtol=1e-6)

    # Also exercise the non-multiple-of-128 (1-D tiling) fallback path.
    y = jax.random.normal(jax.random.PRNGKey(0), (3, 5, 7), dtype=jnp.float32)
    out_y = jax.block_until_ready(const_scale_layer(y, scale, force_pallas=True))
    assert out_y.shape == y.shape and out_y.dtype == y.dtype
    assert jnp.allclose(out_y, y * jnp.float32(scale), atol=1e-6, rtol=1e-6)

    print("KERNEL_OK")
</pallas_src>

<mosaic_0001>
module attributes {stable_mosaic.version = 11 : i64} {
  func.func @_const_scale_kernel(%arg0: i32, %arg1: memref<1x2048xf32, #tpu.memory_space<vmem>>, %arg2: memref<1x2048xf32, #tpu.memory_space<vmem>>) attributes {dimension_semantics = [#tpu.dimension_semantics<parallel>], iteration_bounds = array<i64: 1>, scalar_prefetch = 0 : i64, scratch_operands = 0 : i64, tpu.core_type = #tpu.core_type<tc>, window_params = [{transform_indices = @transform_0, window_bounds = array<i64: 1, 2048>}, {transform_indices = @transform_1, window_bounds = array<i64: 1, 2048>}]} {
    %c0 = arith.constant 0 : index
    %c0_0 = arith.constant 0 : index
    %0 = vector.load %arg1[%c0, %c0_0] : memref<1x2048xf32, #tpu.memory_space<vmem>>, vector<1x2048xf32>
    %cst = arith.constant 2.500000e+00 : f32
    %1 = vector.broadcast %cst : f32 to vector<1x2048xf32>
    %2 = arith.mulf %0, %1 : vector<1x2048xf32>
    %c0_1 = arith.constant 0 : index
    %c0_2 = arith.constant 0 : index
    %3 = vector.load %arg2[%c0_1, %c0_2] : memref<1x2048xf32, #tpu.memory_space<vmem>>, vector<1x2048xf32>
    tpu.vector_store %arg2[%c0_1, %c0_2], %2 {strides = array<i32>} : memref<1x2048xf32, #tpu.memory_space<vmem>>, vector<1x2048xf32>,
    return
  }
  func.func @transform_0(%arg0: i32) -> (i32, i32) {
    %c0_i32 = arith.constant 0 : i32
    %c0_i32_0 = arith.constant 0 : i32
    return %arg0, %c0_i32 : i32, i32
  }
  func.func @transform_1(%arg0: i32) -> (i32, i32) {
    %c0_i32 = arith.constant 0 : i32
    %c0_i32_0 = arith.constant 0 : i32
    return %arg0, %c0_i32 : i32, i32
  }
}

</mosaic_0001>

<llo_original>
// kernel: tpu_custom_call.1
$region0: #{tpu_custom_call.1}
  #allocation0 [shape = 'u32[]', space=smem, size = 0x4, offset = 0x4, fixed_abs, tag = 'smem constant byte address 0x4 - core index']
  #allocation1 [shape = 'u32[144,128]{1,0:T(1,128)}', space=vmem, size = 0x12000, scoped, tag = 'internal scratch']
  %s0 = inlined_call_operand.hbm [shape: f32[1,2048], index: 0, kind: input, shape index: {}]
  %s1 = inlined_call_operand.hbm [shape: f32[1,2048], index: 1, kind: output, shape index: {}]
  %s2 = sld [smem:[#allocation0]]
  $region18: #{tpu_custom_call.1} parent=0
    _
  %s4 = ssub.s32 1, %s2
  %s5 = scalar_select 0, %s4, %s2
  $region1: #{tpu_custom_call.1} parent=0
    #allocation2 [shape = 'u8[8192]{0}', space=vmem, size = 0x2000, scoped, tag = 'input window, operand 0, single buffered']
    #allocation3 [shape = 's32[1]{0}', space=sflag, size = 0x4, scoped, tag = 'scoped memory for tpu_custom_call.1']
    #allocation4 [shape = 's32[1]{0}', space=sflag, size = 0x4, scoped, tag = 'scoped memory for tpu_custom_call.1']
    #allocation5 [shape = 'u8[8192]{0}', space=vmem, size = 0x2000, scoped, tag = 'output window, operand 0, single buffered']
    %6 = vsyncpa [#allocation3], 0
    %7 = vsyncpa [#allocation4], 0
    // Predicated region
    $region2: #{tpu_custom_call.1} parent=1 // pred_check
      _
    $region3: #{tpu_custom_call.1} parent=1 // pred_check_branch
      %9 = sbr.rel (0) target = $region5
    $region4: #{tpu_custom_call.1} parent=1 // pred_region
      %s11 = ssub.s32 256, 256
      %12 = vsyncadd [#allocation3], %s11
      %s14 = sshll.u32 [#allocation2], 4
      %s15 = int_to_ptr.vmem [resolvable:$true] %s14
      %17 = dma.hbm_to_vmem [thread:$0]  %s0, 256, %s15, [#allocation3]
    $region5: #{tpu_custom_call.1} parent=1 // pred_fallthru
      _
    // Predicated region
    $region6: #{tpu_custom_call.1} parent=1 // pred_check
      _
    $region7: #{tpu_custom_call.1} parent=1 // pred_check_branch
      %19 = sbr.rel (0) target = $region9
    $region8: #{tpu_custom_call.1} parent=1 // pred_region
      %20 = dma.done [#allocation3], 256
    $region9: #{tpu_custom_call.1} parent=1 // pred_fallthru
      _
    %v21 = vld [vmem:[#allocation2] sm:$0xff]
    %v22 = vld [vmem:[#allocation2 + $0x8] sm:$0xff]
    %v23 = vmul.f32 %v21, 2.5
    %v24 = vmul.f32 %v22, 2.5
    %25 = vst [vmem:[#allocation5] sm:$0xff] %v23
    %26 = vst [vmem:[#allocation5 + $0x8] sm:$0xff] %v24
    // Predicated region
    $region10: #{tpu_custom_call.1} parent=1 // pred_check
      _
    $region11: #{tpu_custom_call.1} parent=1 // pred_check_branch
      %28 = sbr.rel (0) target = $region13
    $region12: #{tpu_custom_call.1} parent=1 // pred_region
      %s30 = ssub.s32 256, 256
      %31 = vsyncadd [#allocation4], %s30
      %s33 = sshll.u32 [#allocation5], 4
      %s34 = int_to_ptr.vmem [resolvable:$true] %s33
      %36 = dma.vmem_to_hbm [thread:$0]  %s34, 256, %s1, [#allocation4]
    $region13: #{tpu_custom_call.1} parent=1 // pred_fallthru
      _
    // Predicated region
    $region14: #{tpu_custom_call.1} parent=1 // pred_check
      _
    $region15: #{tpu_custom_call.1} parent=1 // pred_check_branch
      %38 = sbr.rel (0) target = $region17
    $region16: #{tpu_custom_call.1} parent=1 // pred_region
      %39 = dma.done [#allocation4], 256
    $region17: #{tpu_custom_call.1} parent=1 // pred_fallthru
      _
    %40 = vsyncpa [#allocation3], 1
    %41 = vsyncpa [#allocation4], 1

</llo_original>
